<compile_context>
chip_gen: v5e
topology: v5e:2x2
jax: 0.10.0
libtpu: 0.0.40
codegen_flags: <defaults>
</compile_context>

<pallas_src>
import functools
import math

import jax
import jax.numpy as jnp
from jax.experimental import pallas as pl
from jax.experimental.pallas import tpu as pltpu


def _round_up(x, m):
    return ((x + m - 1) // m) * m


def _cdiv(a, b):
    return -(-a // b)


def _sublane_multiple(dtype):
    item = jnp.dtype(dtype).itemsize
    return max(8, 32 // item)          # 8 for f32, 16 for bf16, 32 for int8


def _vmem_budget():
    """(per-block byte budget, vmem_limit_bytes) tuned per TPU generation."""
    try:
        info = pltpu.get_tpu_info()
        cap = getattr(info, "vmem_capacity_bytes", None)
        if cap is not None and cap >= 100 * 1024 * 1024:       # v5e / v6e: 128 MiB VMEM
            return 8 * 1024 * 1024, 64 * 1024 * 1024
    except Exception:
        pass
    return 4 * 1024 * 1024, 32 * 1024 * 1024                   # safe on v7x (64 MiB)


# -----------------------------------------------------------------------------
# Fast path: lane-dense flattened output for (almost) any d.
# -----------------------------------------------------------------------------
def _diffs_flat_kernel(test_ref, train_ref, out_ref, *, period, n_strips):
    # test_ref : (tile_m, period)  test row replicated so test_ref[i, m] = test[i, m % d]
    # train_ref: (1, width)        flattened train chunk: train[j, k] at lane j*d + k
    # out_ref  : (tile_m, width)   flattened diffs chunk (lane-dense)
    t = test_ref[...]
    for s in range(n_strips):                       # static unrolled strip loop
        lo = s * period
        out_ref[:, lo:lo + period] = t - train_ref[:, lo:lo + period]


def _diffs_flat(test2d, train2d, *, period, block_bytes, vmem_limit):
    n_test, d = test2d.shape
    n_train = train2d.shape[0]
    dtype = test2d.dtype
    item = jnp.dtype(dtype).itemsize
    sub = _sublane_multiple(dtype)
    flat = n_train * d

    # Hoisted replication: test_rep[i, m] == test2d[i, m % d]  (period % d == 0).
    reps = period // d
    test_rep = jnp.tile(test2d, (1, reps)) if reps > 1 else test2d
    train_flat = train2d.reshape(1, flat)            # contiguous reshape (free)

    # Row tile: multiple of the sublane packing, bounded by the block budget.
    tile_m = min(1024, _round_up(n_test, sub))
    max_tile_m = max(sub, (block_bytes // (period * item)) // sub * sub)
    tile_m = max(sub, min(tile_m, max_tile_m))

    # Column tile: integer number of period-strips, bounded by the block budget.
    n_col_strips_total = _cdiv(flat, period)
    max_strips_by_budget = max(1, block_bytes // (tile_m * period * item))
    n_strips = int(min(32, n_col_strips_total, max_strips_by_budget))
    width = n_strips * period

    g_rows = _cdiv(n_test, tile_m)
    g_cols = _cdiv(flat, width)

    # v7x has 2 TensorCores: avoid a (1,1) grid so both cores get work.
    if g_rows == 1 and g_cols == 1:
        if n_strips >= 2:
            n_strips = (n_strips + 1) // 2
            width = n_strips * period
        elif tile_m >= 2 * sub:
            tile_m = _round_up(tile_m // 2, sub)
        g_rows = _cdiv(n_test, tile_m)
        g_cols = _cdiv(flat, width)

    kernel = functools.partial(_diffs_flat_kernel, period=period, n_strips=n_strips)

    out_flat = pl.pallas_call(
        kernel,
        out_shape=jax.ShapeDtypeStruct((n_test, flat), dtype),
        grid=(g_rows, g_cols),
        in_specs=[
            pl.BlockSpec((tile_m, period), lambda i, j: (i, 0)),
            pl.BlockSpec((1, width), lambda i, j: (0, j)),
        ],
        out_specs=pl.BlockSpec((tile_m, width), lambda i, j: (i, j)),
        compiler_params=pltpu.CompilerParams(
            dimension_semantics=("parallel", "parallel"),
            vmem_limit_bytes=vmem_limit,
        ),
    )(test_rep, train_flat)

    # Contiguous reshape back to the PyTorch layout (free).
    return out_flat.reshape(n_test, n_train, d)


# -----------------------------------------------------------------------------
# Fallback path (only when lcm(d, 128) is impractically large): 3-D output,
# n_train tiled as a second parallel grid axis so VMEM stays bounded.
# -----------------------------------------------------------------------------
def _diffs_general_kernel(test_ref, train_ref, out_ref):
    out_ref[...] = test_ref[...][:, None, :] - train_ref[...][None, :, :]


def _diffs_general(test2d, train2d, *, block_bytes, vmem_limit):
    n_test, d = test2d.shape
    n_train = train2d.shape[0]
    dtype = test2d.dtype
    item = jnp.dtype(dtype).itemsize
    sub = _sublane_multiple(dtype)
    d_pad = _round_up(d, 128)

    # Train tile (second-to-last dim of the output block): multiple of the
    # sublane packing or the full axis.
    tile_n = n_train if n_train <= 8 * sub else 8 * sub

    # Test tile bounded by the padded output-block footprint.
    row_bytes = max(1, tile_n * d_pad * item)
    tile_m = max(1, block_bytes // row_bytes)
    if tile_m >= n_test:
        tile_m = n_test
    else:
        tile_m = max(sub, min(512, (tile_m // sub) * sub))

    grid = (_cdiv(n_test, tile_m), _cdiv(n_train, tile_n))

    return pl.pallas_call(
        _diffs_general_kernel,
        out_shape=jax.ShapeDtypeStruct((n_test, n_train, d), dtype),
        grid=grid,
        in_specs=[
            pl.BlockSpec((tile_m, d), lambda i, j: (i, 0)),
            pl.BlockSpec((tile_n, d), lambda i, j: (j, 0)),
        ],
        out_specs=pl.BlockSpec((tile_m, tile_n, d), lambda i, j: (i, j, 0)),
        compiler_params=pltpu.CompilerParams(
            dimension_semantics=("parallel", "parallel"),
            vmem_limit_bytes=vmem_limit,
        ),
    )(test2d, train2d)


# -----------------------------------------------------------------------------
# Public wrapper (mirrors torch's Kernel._diffs semantics, incl. >2-D features)
# -----------------------------------------------------------------------------
def pallas_diffs(test_Xs, train_Xs):
    """diffs[i, j, ...] = test_Xs[i, ...] - train_Xs[j, ...] (Pallas TPU)."""
    n_test = test_Xs.shape[0]
    n_train = train_Xs.shape[0]
    feat_shape = tuple(test_Xs.shape[1:])
    assert feat_shape == tuple(train_Xs.shape[1:]), "feature shapes must match"

    d = math.prod(feat_shape) if feat_shape else 1
    assert d > 0, "feature dimension must be non-empty"

    dtype = jnp.result_type(test_Xs.dtype, train_Xs.dtype)
    t2 = test_Xs.reshape(n_test, d).astype(dtype)
    r2 = train_Xs.reshape(n_train, d).astype(dtype)

    item = jnp.dtype(dtype).itemsize
    sub = _sublane_multiple(dtype)
    block_bytes, vmem_limit = _vmem_budget()

    period = d * (128 // math.gcd(d, 128))            # lcm(d, 128)

    if period <= 65536 and period * sub * item <= block_bytes:
        out = _diffs_flat(t2, r2, period=period,
                          block_bytes=block_bytes, vmem_limit=vmem_limit)
    else:
        out = _diffs_general(t2, r2, block_bytes=block_bytes,
                             vmem_limit=vmem_limit)

    return out.reshape((n_test, n_train) + feat_shape)


class KernelPallas:
    """JAX/Pallas analogue of domainbed.lib.misc.Kernel (base class)."""

    def __init__(self, bw=None):
        self.bw = 0.05 if bw is None else bw

    def _diffs(self, test_Xs, train_Xs):
        return pallas_diffs(test_Xs, train_Xs)

    def forward(self, test_Xs, train_Xs):
        # TODO(synk): abstract in the reference module (empty body); concrete
        # subclasses should fuse their feature-axis reduction on the MXU rather
        # than materializing diffs.
        return None

    def sample(self, train_Xs):
        # TODO(synk): abstract in the reference module; no semantics defined.
        return None

    __call__ = forward


if __name__ == "__main__":
    key = jax.random.PRNGKey(0)
    k_test, k_train, k_test2, k_train2 = jax.random.split(key, 4)
    kern = KernelPallas()

    # Case 1: d divides 128 (period = 128), shapes from the module's typical use.
    n_test, n_train, d = 16, 8, 32
    test_Xs = jax.random.normal(k_test, (n_test, d), dtype=jnp.float32)
    train_Xs = jax.random.normal(k_train, (n_train, d), dtype=jnp.float32)
    diffs = jax.block_until_ready(kern._diffs(test_Xs, train_Xs))
    ref = test_Xs[:, None, :] - train_Xs[None, :, :]
    assert diffs.shape == (n_test, n_train, d)
    assert diffs.dtype == ref.dtype
    assert jnp.allclose(diffs, ref, atol=1e-6)

    # Case 2: d does not divide 128 (period = lcm(20, 128) = 640 replication path).
    n_test2, n_train2, d2 = 16, 32, 20
    test2 = jax.random.normal(k_test2, (n_test2, d2), dtype=jnp.float32)
    train2 = jax.random.normal(k_train2, (n_train2, d2), dtype=jnp.float32)
    diffs2 = jax.block_until_ready(kern._diffs(test2, train2))
    ref2 = test2[:, None, :] - train2[None, :, :]
    assert diffs2.shape == (n_test2, n_train2, d2)
    assert jnp.allclose(diffs2, ref2, atol=1e-6)

    print("KERNEL_OK")
</pallas_src>

<mosaic_0001>
module attributes {stable_mosaic.version = 11 : i64} {
  func.func @_diffs_flat_kernel(%arg0: i32, %arg1: i32, %arg2: memref<16x128xf32, #tpu.memory_space<vmem>>, %arg3: memref<1x128xf32, #tpu.memory_space<vmem>>, %arg4: memref<16x128xf32, #tpu.memory_space<vmem>>) attributes {dimension_semantics = [#tpu.dimension_semantics<parallel>, #tpu.dimension_semantics<parallel>], iteration_bounds = array<i64: 1, 2>, scalar_prefetch = 0 : i64, scratch_operands = 0 : i64, tpu.core_type = #tpu.core_type<tc>, window_params = [{transform_indices = @transform_0, window_bounds = array<i64: 16, 128>}, {transform_indices = @transform_1, window_bounds = array<i64: 1, 128>}, {transform_indices = @transform_2, window_bounds = array<i64: 16, 128>}]} {
    %c0 = arith.constant 0 : index
    %c0_0 = arith.constant 0 : index
    %0 = vector.load %arg2[%c0, %c0_0] : memref<16x128xf32, #tpu.memory_space<vmem>>, vector<16x128xf32>
    %c0_1 = arith.constant 0 : index
    %c0_2 = arith.constant 0 : index
    %1 = vector.load %arg3[%c0_1, %c0_2] : memref<1x128xf32, #tpu.memory_space<vmem>>, vector<1x128xf32>
    %2 = vector.broadcast %1 : vector<1x128xf32> to vector<16x128xf32>
    %3 = arith.subf %0, %2 : vector<16x128xf32>
    %c0_3 = arith.constant 0 : index
    %c0_4 = arith.constant 0 : index
    %4 = vector.load %arg4[%c0_3, %c0_4] : memref<16x128xf32, #tpu.memory_space<vmem>>, vector<16x128xf32>
    tpu.vector_store %arg4[%c0_3, %c0_4], %3 {strides = array<i32>} : memref<16x128xf32, #tpu.memory_space<vmem>>, vector<16x128xf32>,
    return
  }
  func.func @transform_0(%arg0: i32, %arg1: i32) -> (i32, i32) {
    %c0_i32 = arith.constant 0 : i32
    %c0_i32_0 = arith.constant 0 : i32
    return %arg0, %c0_i32 : i32, i32
  }
  func.func @transform_1(%arg0: i32, %arg1: i32) -> (i32, i32) {
    %c0_i32 = arith.constant 0 : i32
    %c0_i32_0 = arith.constant 0 : i32
    return %c0_i32, %arg1 : i32, i32
  }
  func.func @transform_2(%arg0: i32, %arg1: i32) -> (i32, i32) {
    %c0_i32 = arith.constant 0 : i32
    return %arg0, %arg1 : i32, i32
  }
}

</mosaic_0001>

<llo_original>
// kernel: tpu_custom_call.1
$region0: #{tpu_custom_call.1}
  #allocation0 [shape = 'u32[]', space=smem, size = 0x4, offset = 0x4, fixed_abs, tag = 'smem constant byte address 0x4 - core index']
  #allocation1 [shape = 'u32[72,128]{1,0:T(1,128)}', space=vmem, size = 0x9000, scoped, tag = 'internal scratch']
  %s0 = inlined_call_operand.hbm [shape: f32[16,128], index: 0, kind: input, shape index: {}]
  %s1 = inlined_call_operand.hbm [shape: f32[1,256], index: 1, kind: input, shape index: {}]
  %s2 = inlined_call_operand.hbm [shape: f32[16,256], index: 2, kind: output, shape index: {}]
  %s3 = sld [smem:[#allocation0]]
  $region49: #{tpu_custom_call.1} parent=0
    _
  %s5 = ssub.s32 1, %s3
  %s6 = scalar_select 0, %s5, %s3
  $region1: #{tpu_custom_call.1} parent=0
    #allocation2 [shape = 'u8[8192]{0}', space=vmem, size = 0x2000, scoped, tag = 'input window, operand 0, single buffered']
    #allocation3 [shape = 's32[2]{0}', space=sflag, size = 0x8, scoped, tag = 'scoped memory for tpu_custom_call.1']
    #allocation4 [shape = 's32[2]{0}', space=sflag, size = 0x8, scoped, tag = 'scoped memory for tpu_custom_call.1']
    #allocation5 [shape = 'u8[1024]{0}', space=vmem, size = 0x400, scoped, tag = 'input window, operand 1']
    #allocation6 [shape = 's32[2]{0}', space=sflag, size = 0x8, scoped, tag = 'scoped memory for tpu_custom_call.1']
    #allocation7 [shape = 'u8[16384]{0}', space=vmem, size = 0x4000, scoped, tag = 'output window, operand 0']
    %7 = vsyncpa [#allocation3], 0
    %8 = vsyncpa [#allocation6], 0
    %s9 = scalar_lea.sflag [#allocation6], 1
    %10 = vsyncpa %s9, 0
    %11 = vsyncpa [#allocation4], 0
    %s12 = scalar_lea.sflag [#allocation4], 1
    %13 = vsyncpa %s12, 0
    loop: start=0, step=1, limit=4
    $region2: #{tpu_custom_call.1} parent=1 // loop_pre_header
      _
    $region3: #{tpu_custom_call.1} parent=1 // loop_header
      %s15 = sphi 0, %s19
      %p16 = scmp.ge.s32.totalorder %s15, 4
      %s22 = sphi 0, %s34
      %s23 = sphi 0, %s30
      %s24 = sphi 0, %s22
      %s25 = sphi 0, %s23
      %s26 = sphi 0, %s24
      %s27 = sphi 0, %s25
      %s37 = sphi 0, %s39
      %s40 = sphi 0, %s37
      %s41 = sphi 0, %s40
      %s57 = sphi 0, %s41
      %s63 = sphi 0, %s65
      %s66 = sphi 0, %s63
      %s67 = sphi 0, %s66
      %s83 = sphi 0, %s67
      %s91 = sphi 0, %s93
      %s94 = sphi 0, %s91
      %s95 = sphi 0, %s94
      %s111 = sphi 0, %s95
    $region4: #{tpu_custom_call.1} parent=1 // loop_header_branch
      %18 = sbr.rel (%p16) target = $region8
    $region5: #{tpu_custom_call.1} parent=1 // loop_body
      %s20 = ssub.s32 %s15, 1
      %s21 = ssub.s32 %s15, 2
      %s28 = sadd.s32 1, %s23
      %p29 = scmp.ge.s32.totalorder %s28, 2
      %s30 = scalar_select %p29, 0, %s28
      %s31 = sadd.s32 1, %s22
      %s32 = scalar_select %p29, %s31, %s22
      %p33 = scmp.ge.s32.totalorder %s32, 1
      %s34 = scalar_select %p33, 0, %s32
      %s35 = ssub.s32 %s22, %s34
      %p36 = scmp.eq.s32.totalorder %s35, 0
      %s38 = sadd.s32 %s37, 1
      %s39 = scalar_select %p36, %s37, %s38
      %p42 = pneg %p36
      %p43 = scmp.eq.s32.totalorder %s15, 1
      %p44 = por %p42, %p43
      %p45 = scmp.ne.s32.totalorder %s37, %s40
      %p46 = scmp.eq.s32.totalorder %s15, 0
      %p47 = por %p45, %p46
      %p48 = scmp.ne.s32.totalorder %s37, %s40
      %p49 = scmp.eq.s32.totalorder %s20, 1
      %p50 = por %p48, %p49
      %p51 = scmp.ne.s32.totalorder %s40, %s41
      %p52 = scmp.eq.s32.totalorder %s20, 0
      %p53 = por %p51, %p52
      %p54 = scmp.ne.s32.totalorder %s40, %s41
      %p55 = scmp.eq.s32.totalorder %s21, 1
      %p56 = por %p54, %p55
      %p58 = scmp.ne.s32.totalorder %s41, %s57
      %p59 = scmp.eq.s32.totalorder %s21, 0
      %p60 = por %p58, %p59
      %s61 = ssub.s32 %s23, %s30
      %p62 = scmp.eq.s32.totalorder %s61, 0
      %s64 = sadd.s32 %s63, 1
      %s65 = scalar_select %p62, %s63, %s64
      %p68 = pneg %p62
      %p69 = scmp.eq.s32.totalorder %s15, 1
      %p70 = por %p68, %p69
      %p71 = scmp.ne.s32.totalorder %s63, %s66
      %p72 = scmp.eq.s32.totalorder %s15, 0
      %p73 = por %p71, %p72
      %p74 = scmp.ne.s32.totalorder %s63, %s66
      %p75 = scmp.eq.s32.totalorder %s20, 1
      %p76 = por %p74, %p75
      %p77 = scmp.ne.s32.totalorder %s66, %s67
      %p78 = scmp.eq.s32.totalorder %s20, 0
      %p79 = por %p77, %p78
      %p80 = scmp.ne.s32.totalorder %s66, %s67
      %p81 = scmp.eq.s32.totalorder %s21, 1
      %p82 = por %p80, %p81
      %p84 = scmp.ne.s32.totalorder %s67, %s83
      %p85 = scmp.eq.s32.totalorder %s21, 0
      %p86 = por %p84, %p85
      %s87 = ssub.s32 %s22, %s34
      %s88 = ssub.s32 %s23, %s30
      %s89 = sor.u32 %s87, %s88
      %p90 = scmp.eq.s32.totalorder %s89, 0
      %s92 = sadd.s32 %s91, 1
      %s93 = scalar_select %p90, %s91, %s92
      %p96 = pneg %p90
      %p97 = scmp.eq.s32.totalorder %s15, 1
      %p98 = por %p96, %p97
      %p99 = scmp.ne.s32.totalorder %s91, %s94
      %p100 = scmp.eq.s32.totalorder %s15, 0
      %p101 = por %p99, %p100
      %p102 = scmp.ne.s32.totalorder %s91, %s94
      %p103 = scmp.eq.s32.totalorder %s20, 1
      %p104 = por %p102, %p103
      %p105 = scmp.ne.s32.totalorder %s94, %s95
      %p106 = scmp.eq.s32.totalorder %s20, 0
      %p107 = por %p105, %p106
      %p108 = scmp.ne.s32.totalorder %s94, %s95
      %p109 = scmp.eq.s32.totalorder %s21, 1
      %p110 = por %p108, %p109
      %p112 = scmp.ne.s32.totalorder %s95, %s111
      %p113 = scmp.eq.s32.totalorder %s21, 0
      %p114 = por %p112, %p113
      %p115 = scmp.le.s32.totalorder 1, %s15
      %p116 = scmp.lt.s32.totalorder %s15, 3
      %p117 = pnand %p115, %p116
      %p118 = pneg %p117
      // Predicated region
      $region9: #{tpu_custom_call.1} parent=5 // pred_check
        _
      $region10: #{tpu_custom_call.1} parent=5 // pred_check_branch
        %120 = sbr.rel (%p117) target = $region12
      $region11: #{tpu_custom_call.1} parent=5 // pred_region
        %s121 = ssub.s32 %s15, 1
        // Predicated region
        $region13: #{tpu_custom_call.1} parent=11 // pred_check
          %p122 = pneg %p53
        $region14: #{tpu_custom_call.1} parent=11 // pred_check_branch
          %124 = sbr.rel (%p122) target = $region16
        $region15: #{tpu_custom_call.1} parent=11 // pred_region
          %s125 = smul.u32 2, %s24
          %127 = vsyncadd [#allocation3], 0
          %s128 = smul.addr %s125, 8
          %s129 = scalar_lea.hbm %s0, %s128
          %s130 = sshll.u32 %s129, 4
          %s131 = int_to_ptr.hbm [resolvable:$true] %s130
          %s132 = sshll.u32 [#allocation2], 4
          %s133 = int_to_ptr.vmem [resolvable:$true] %s132
          %138 = dma.hbm_to_vmem [thread:$0]  %s131, 256, %s133, [#allocation3], 128, 128, 8
        $region16: #{tpu_custom_call.1} parent=11 // pred_fallthru
          _
      $region12: #{tpu_custom_call.1} parent=5 // pred_fallthru
        _
      %p139 = scmp.lt.s32.totalorder %s15, 2
      // Predicated region
      $region17: #{tpu_custom_call.1} parent=5 // pred_check
        %p140 = pneg %p139
      $region18: #{tpu_custom_call.1} parent=5 // pred_check_branch
        %142 = sbr.rel (%p140) target = $region20
      $region19: #{tpu_custom_call.1} parent=5 // pred_region
        // Predicated region
        $region21: #{tpu_custom_call.1} parent=19 // pred_check
          %p143 = pneg %p73
        $region22: #{tpu_custom_call.1} parent=19 // pred_check_branch
          %145 = sbr.rel (%p143) target = $region24
        $region23: #{tpu_custom_call.1} parent=19 // pred_region
          %s146 = sand.u32 %s63, 1
          %s147 = scalar_lea.sflag [#allocation6], %s146
          %s148 = sand.u32 %s63, 1
          %s149 = scalar_lea.vmem [#allocation5], %s148
          %151 = vsyncadd %s147, 0
          %s152 = scalar_lea.hbm %s1, %s23
          %s154 = sshll.u32 %s152, 4
          %s155 = int_to_ptr.hbm [resolvable:$true] %s154
          %s156 = sshll.u32 %s149, 4
          %s157 = int_to_ptr.vmem [resolvable:$true] %s156
          %159 = dma.hbm_to_vmem [thread:$0]  %s155, 16, %s157, %s147
        $region24: #{tpu_custom_call.1} parent=19 // pred_fallthru
          _
      $region20: #{tpu_custom_call.1} parent=5 // pred_fallthru
        _
      %p160 = scmp.le.s32.totalorder 1, %s15
      %p161 = scmp.lt.s32.totalorder %s15, 3
      %p162 = pnand %p160, %p161
      %p163 = pneg %p162
      // Predicated region
      $region25: #{tpu_custom_call.1} parent=5 // pred_check
        _
      $region26: #{tpu_custom_call.1} parent=5 // pred_check_branch
        %165 = sbr.rel (%p162) target = $region28
      $region27: #{tpu_custom_call.1} parent=5 // pred_region
        %s166 = ssub.s32 %s15, 1
        // Predicated region
        $region29: #{tpu_custom_call.1} parent=27 // pred_check
          %p167 = pneg %p53
        $region30: #{tpu_custom_call.1} parent=27 // pred_check_branch
          %169 = sbr.rel (%p167) target = $region32
        $region31: #{tpu_custom_call.1} parent=27 // pred_region
          %171 = dma.done [#allocation3], 256
        $region32: #{tpu_custom_call.1} parent=27 // pred_fallthru
          _
        %s172 = sand.u32 %s66, 1
        %s173 = scalar_lea.sflag [#allocation6], %s172
        %s174 = sand.u32 %s66, 1
        %s175 = scalar_lea.vmem [#allocation5], %s174
        // Predicated region
        $region33: #{tpu_custom_call.1} parent=27 // pred_check
          %p176 = pneg %p79
        $region34: #{tpu_custom_call.1} parent=27 // pred_check_branch
          %178 = sbr.rel (%p176) target = $region36
        $region35: #{tpu_custom_call.1} parent=27 // pred_region
          %180 = dma.done %s173, 16
        $region36: #{tpu_custom_call.1} parent=27 // pred_fallthru
          _
        %p181 = pneg %p53
        %p182 = pneg %p50
        %s183 = sand.u32 %s66, 1
        %s184 = scalar_lea.sflag [#allocation6], %s183
        %s185 = sand.u32 %s66, 1
        %s186 = scalar_lea.vmem [#allocation5], %s185
        %p187 = pneg %p79
        %p188 = pneg %p76
        %p189 = pneg %p107
        %p190 = pneg %p104
        %s191 = sand.u32 %s94, 1
        %s192 = scalar_lea.sflag [#allocation4], %s191
        %s193 = sand.u32 %s94, 1
        %s194 = smul.addr %s193, 16
        %s195 = scalar_lea.vmem [#allocation7], %s194
        %s196 = smul.u32 2, %s24
        %s197 = smul.u32 2, %s24
        %v198 = vld [vmem:[#allocation2] sm:$0xff]
        %v199 = vld [vmem:[#allocation2 + $0x8] sm:$0xff]
        %v200 = vld [vmem:[%s175] sm:$0x1]
        %v202 = vperm.slane %v200, 0
        %v204 = vsub.f32 %v198, %v202
        %v205 = vsub.f32 %v199, %v202
        %206 = vst [vmem:[%s195] sm:$0xff] %v204
        %207 = vst [vmem:[%s195 + $0x8] sm:$0xff] %v205
        %s208 = sand.u32 %s94, 1
        %s209 = scalar_lea.sflag [#allocation4], %s208
        %s210 = sand.u32 %s94, 1
        %s211 = smul.addr %s210, 16
        %s212 = scalar_lea.vmem [#allocation7], %s211
        // Predicated region
        $region37: #{tpu_custom_call.1} parent=27 // pred_check
          %p213 = pneg %p104
        $region38: #{tpu_custom_call.1} parent=27 // pred_check_branch
          %215 = sbr.rel (%p213) target = $region40
        $region39: #{tpu_custom_call.1} parent=27 // pred_region
          %s216 = smul.u32 2, %s24
          %218 = vsyncadd %s209, 0
          %s219 = smul.addr %s216, 2
          %s220 = sadd.s32 %s25, %s219
          %s221 = smul.addr %s220, 8
          %s222 = scalar_lea.hbm %s2, %s221
          %s223 = sshll.u32 %s212, 4
          %s224 = int_to_ptr.vmem [resolvable:$true] %s223
          %s225 = sshll.u32 %s222, 4
          %s226 = int_to_ptr.hbm [resolvable:$true] %s225
          %231 = dma.vmem_to_hbm [thread:$0]  %s224, 256, %s226, %s209, 128, 256, 8
        $region40: #{tpu_custom_call.1} parent=27 // pred_fallthru
          _
      $region28: #{tpu_custom_call.1} parent=5 // pred_fallthru
        _
      %p232 = scmp.le.s32.totalorder 2, %s15
      // Predicated region
      $region41: #{tpu_custom_call.1} parent=5 // pred_check
        %p233 = pneg %p232
      $region42: #{tpu_custom_call.1} parent=5 // pred_check_branch
        %235 = sbr.rel (%p233) target = $region44
      $region43: #{tpu_custom_call.1} parent=5 // pred_region
        %s236 = ssub.s32 %s15, 2
        // Predicated region
        $region45: #{tpu_custom_call.1} parent=43 // pred_check
          %p237 = pneg %p110
        $region46: #{tpu_custom_call.1} parent=43 // pred_check_branch
          %239 = sbr.rel (%p237) target = $region48
        $region47: #{tpu_custom_call.1} parent=43 // pred_region
          %s240 = sand.u32 %s95, 1
          %s241 = scalar_lea.sflag [#allocation4], %s240
          %s242 = sand.u32 %s95, 1
          %s243 = smul.addr %s242, 16
          %s244 = scalar_lea.vmem [#allocation7], %s243
          %246 = dma.done %s241, 256
        $region48: #{tpu_custom_call.1} parent=43 // pred_fallthru
          _
      $region44: #{tpu_custom_call.1} parent=5 // pred_fallthru
        _
    $region6: #{tpu_custom_call.1} parent=1 // loop_footer
      %s19 = sadd.s32 1, %s15
    $region7: #{tpu_custom_call.1} parent=1 // loop_footer_branch
      %14 = sbr.rel target = $region3
    $region8: #{tpu_custom_call.1} parent=1 // loop_exit
      _
    %247 = vsyncpa [#allocation3], 1
    %s248 = scalar_lea.sflag [#allocation3], 1
    %249 = vsyncpa %s248, 1
    %250 = vsyncpa [#allocation6], 1
    %s251 = scalar_lea.sflag [#allocation6], 1
    %252 = vsyncpa %s251, 1
    %253 = vsyncpa [#allocation4], 1
    %s254 = scalar_lea.sflag [#allocation4], 1
    %255 = vsyncpa %s254, 1

</llo_original>
